<compile_context>
chip_gen: v6e
topology: v6e:2x2x1
jax: 0.10.0
libtpu: 0.0.40
codegen_flags: <defaults>
</compile_context>

<pallas_src>
import jax
import jax.numpy as jnp
from jax.experimental import pallas as pl
from jax.experimental.pallas import tpu as pltpu

_BLOCK_BYTES = 6 * 1024 * 1024        # ~6 MiB per block (review: 6-8 MiB sweet spot on v6e/v7x)
_VMEM_LIMIT_BYTES = 40 * 1024 * 1024  # 2 in + 2 out buffers (~24 MiB) + headroom; < 64 MiB v7x physical


def _affine_kernel(scale_ref, bias_ref, x_ref, o_ref):
    # scale_ref / bias_ref: (1,) float32 scalars in SMEM.
    # x_ref / o_ref: (tile_rows, lane_width) VMEM tiles.
    s = scale_ref[0]
    b = bias_ref[0]
    y = s * x_ref[...].astype(jnp.float32) + b
    o_ref[...] = y.astype(o_ref.dtype)


def _pick_lane_width(n):
    # Widest lane-dense last dim that divides n exactly; else 128 (tail handled outside Pallas).
    for w in (1024, 512, 256, 128):
        if n % w == 0:
            return w
    return 128


def _sublane_multiple(dtype):
    # Rows per sublane pack: 8 for 4-byte, 16 for 2-byte, 32 for 1-byte dtypes.
    return {4: 8, 2: 16, 1: 32}.get(jnp.dtype(dtype).itemsize, 8)


def learnable_affine_block(x, scale, bias, *, use_pallas=None, block_bytes=None, donate_x=False):
    """y = scale * x + bias, elementwise. x: any-shape float array; scale/bias: shape-(1,)."""
    orig_shape = x.shape
    orig_dtype = x.dtype
    n = x.size
    itemsize = jnp.dtype(orig_dtype).itemsize
    if block_bytes is None:
        block_bytes = _BLOCK_BYTES

    scale32 = scale.astype(jnp.float32).reshape((1,))
    bias32 = bias.astype(jnp.float32).reshape((1,))

    def _xla_affine(v):
        return (scale32[0] * v.astype(jnp.float32) + bias32[0]).astype(orig_dtype)

    if use_pallas is None:
        # Require >=2 grid steps before taking the Pallas path; below that XLA's fused
        # elementwise op ties or wins and avoids the Mosaic launch + un-overlapped DMA cost.
        use_pallas = (n * itemsize) >= 2 * block_bytes
    if (not use_pallas) or n < 128:
        return _xla_affine(x)

    lane_width = _pick_lane_width(n)
    rows = n // lane_width
    n_bulk = rows * lane_width
    tail = n - n_bulk  # < lane_width (only when n is not a multiple of 128)

    x_flat = jnp.ravel(x)
    x_bulk = x_flat if tail == 0 else x_flat[:n_bulk]
    x2d = x_bulk.reshape(rows, lane_width)  # contiguous reshape

    sub = _sublane_multiple(orig_dtype)
    row_bytes = lane_width * itemsize
    tile_rows = max(sub, (block_bytes // row_bytes) // sub * sub)
    if tile_rows >= rows:
        tile_rows = rows  # single block == full array (satisfies block-shape rule)
    grid = (pl.cdiv(rows, tile_rows),)  # partial last block is masked by Pallas

    call_kwargs = {}
    if donate_x:
        # Alias the activation into the output when the caller can donate x.
        call_kwargs["input_output_aliases"] = {2: 0}

    out2d = pl.pallas_call(
        _affine_kernel,
        out_shape=jax.ShapeDtypeStruct((rows, lane_width), orig_dtype),
        grid_spec=pltpu.PrefetchScalarGridSpec(
            num_scalar_prefetch=0,
            grid=grid,
            in_specs=[
                pl.BlockSpec(memory_space=pltpu.MemorySpace.SMEM),  # scale (1,) f32
                pl.BlockSpec(memory_space=pltpu.MemorySpace.SMEM),  # bias  (1,) f32
                pl.BlockSpec((tile_rows, lane_width), lambda i: (i, 0)),
            ],
            out_specs=pl.BlockSpec((tile_rows, lane_width), lambda i: (i, 0)),
        ),
        compiler_params=pltpu.CompilerParams(
            dimension_semantics=("parallel",),       # shards the row axis across v7x's 2 TCs
            vmem_limit_bytes=_VMEM_LIMIT_BYTES,      # 6 MiB blocks need > v5e's 16 MiB default
        ),
        **call_kwargs,
    )(scale32, bias32, x2d)

    y_flat = out2d.reshape(-1)
    if tail != 0:
        # Rare path: tiny (<128 element) tail handled by the scalar XLA expression; no full-tensor
        # pad / un-pad passes over HBM.
        y_flat = jnp.concatenate([y_flat, _xla_affine(x_flat[n_bulk:])])
    return y_flat.reshape(orig_shape)


if __name__ == "__main__":
    key = jax.random.PRNGKey(0)
    k1, k2, k3, k4 = jax.random.split(key, 4)

    # Parameters as in nn.Parameter(torch.tensor([scale_value])) / ([bias_value]).
    scale = jnp.array([1.5], dtype=jnp.float32)
    bias = jnp.array([-0.25], dtype=jnp.float32)

    # Case 1: module-typical small NCHW input, Pallas path forced (single full-array block).
    x1 = jax.random.normal(k1, (2, 4, 16, 16), dtype=jnp.float32)
    y1 = jax.block_until_ready(learnable_affine_block(x1, scale, bias, use_pallas=True))
    ref1 = scale[0] * x1 + bias[0]
    assert y1.shape == x1.shape and y1.dtype == x1.dtype
    assert jnp.allclose(y1, ref1, atol=1e-6), "mismatch (case 1)"

    # Case 2: multi-block pipelined grid (block size shrunk so a small tensor spans 4 blocks).
    x2 = jax.random.normal(k2, (4, 32, 32, 32), dtype=jnp.float32)
    y2 = jax.block_until_ready(
        learnable_affine_block(x2, scale, bias, use_pallas=True, block_bytes=128 * 1024))
    ref2 = scale[0] * x2 + bias[0]
    assert jnp.allclose(y2, ref2, atol=1e-6), "mismatch (case 2)"

    # Case 3: awkward element count (not a multiple of 128) -> Pallas bulk + tiny XLA tail.
    x3 = jax.random.normal(k3, (3, 5, 7, 11), dtype=jnp.float32)
    y3 = jax.block_until_ready(learnable_affine_block(x3, scale, bias, use_pallas=True))
    ref3 = scale[0] * x3 + bias[0]
    assert y3.shape == x3.shape
    assert jnp.allclose(y3, ref3, atol=1e-6), "mismatch (case 3)"

    # Case 4: bf16 activations exercise the 16-row sublane-packing multiple and multi-block grid.
    x4 = jax.random.normal(k4, (4, 16, 32, 32), dtype=jnp.bfloat16)
    y4 = jax.block_until_ready(
        learnable_affine_block(x4, scale, bias, use_pallas=True, block_bytes=64 * 1024))
    ref4 = (scale[0] * x4.astype(jnp.float32) + bias[0]).astype(jnp.bfloat16)
    assert y4.dtype == jnp.bfloat16 and y4.shape == x4.shape
    assert jnp.allclose(y4.astype(jnp.float32), ref4.astype(jnp.float32), atol=1e-2), "mismatch (case 4)"

    print("KERNEL_OK")
</pallas_src>

<mosaic_0001>
module attributes {stable_mosaic.version = 11 : i64} {
  func.func @_affine_kernel(%arg0: i32, %arg1: memref<1xf32, #tpu.memory_space<smem>>, %arg2: memref<1xf32, #tpu.memory_space<smem>>, %arg3: memref<2x1024xf32, #tpu.memory_space<vmem>>, %arg4: memref<2x1024xf32, #tpu.memory_space<vmem>>) attributes {dimension_semantics = [#tpu.dimension_semantics<parallel>], iteration_bounds = array<i64: 1>, scalar_prefetch = 0 : i64, scratch_operands = 0 : i64, tpu.core_type = #tpu.core_type<tc>, window_params = [{transform_indices = @transform_0, window_bounds = array<i64: 1>}, {transform_indices = @transform_1, window_bounds = array<i64: 1>}, {transform_indices = @transform_2, window_bounds = array<i64: 2, 1024>}, {transform_indices = @transform_3, window_bounds = array<i64: 2, 1024>}]} {
    %c0 = arith.constant 0 : index
    %0 = memref.load %arg1[%c0] : memref<1xf32, #tpu.memory_space<smem>>
    %c0_0 = arith.constant 0 : index
    %1 = memref.load %arg2[%c0_0] : memref<1xf32, #tpu.memory_space<smem>>
    %c0_1 = arith.constant 0 : index
    %c0_2 = arith.constant 0 : index
    %2 = vector.load %arg3[%c0_1, %c0_2] : memref<2x1024xf32, #tpu.memory_space<vmem>>, vector<2x1024xf32>
    %3 = vector.broadcast %0 : f32 to vector<2x1024xf32>
    %4 = arith.mulf %3, %2 : vector<2x1024xf32>
    %5 = vector.broadcast %1 : f32 to vector<2x1024xf32>
    %6 = arith.addf %4, %5 : vector<2x1024xf32>
    %c0_3 = arith.constant 0 : index
    %c0_4 = arith.constant 0 : index
    %7 = vector.load %arg4[%c0_3, %c0_4] : memref<2x1024xf32, #tpu.memory_space<vmem>>, vector<2x1024xf32>
    tpu.vector_store %arg4[%c0_3, %c0_4], %6 {strides = array<i32>} : memref<2x1024xf32, #tpu.memory_space<vmem>>, vector<2x1024xf32>,
    return
  }
  func.func @transform_0(%arg0: i32) -> i32 {
    %c0_i32 = arith.constant 0 : i32
    %c0_i32_0 = arith.constant 0 : i32
    return %c0_i32 : i32
  }
  func.func @transform_1(%arg0: i32) -> i32 {
    %c0_i32 = arith.constant 0 : i32
    %c0_i32_0 = arith.constant 0 : i32
    return %c0_i32 : i32
  }
  func.func @transform_2(%arg0: i32) -> (i32, i32) {
    %c0_i32 = arith.constant 0 : i32
    %c0_i32_0 = arith.constant 0 : i32
    return %arg0, %c0_i32 : i32, i32
  }
  func.func @transform_3(%arg0: i32) -> (i32, i32) {
    %c0_i32 = arith.constant 0 : i32
    %c0_i32_0 = arith.constant 0 : i32
    return %arg0, %c0_i32 : i32, i32
  }
}

</mosaic_0001>

<llo_original>
// kernel: tpu_custom_call.1
$region0: #{tpu_custom_call.1}
  #allocation0 [shape = 'u32[]', space=smem, size = 0x4, offset = 0x4, fixed_abs, tag = 'smem constant byte address 0x4 - core index']
  #allocation1 [shape = 'u32[144,128]{1,0:T(1,128)}', space=vmem, size = 0x12000, scoped, tag = 'internal scratch']
  #allocation2 [shape = 'f32[1]{0:T(128)S(6)}', space=smem, size = 0x200, scoped, tag = 'scoped memory for tpu_custom_call.1']
  #allocation3 [shape = 'f32[1]{0:T(128)S(6)}', space=smem, size = 0x200, scoped, tag = 'scoped memory for tpu_custom_call.1']
  %s0 = inlined_call_operand.<no memory space> [shape: f32[1], index: 0, kind: input, shape index: {}]
  %s1 = inlined_call_operand.<no memory space> [shape: f32[1], index: 1, kind: input, shape index: {}]
  %s2 = inlined_call_operand.hbm [shape: f32[2,1024], index: 2, kind: input, shape index: {}]
  %s3 = inlined_call_operand.hbm [shape: f32[2,1024], index: 3, kind: output, shape index: {}]
  %s4 = sld [smem:[#allocation0]]
  $region26: #{tpu_custom_call.1} parent=0
    _
  %s6 = ssub.s32 1, %s4
  %s7 = scalar_select 0, %s6, %s4
  %8 = sst [smem:[#allocation2]] %s0
  %9 = sst [smem:[#allocation3]] %s1
  $region1: #{tpu_custom_call.1} parent=0
    #allocation4 [shape = 'u8[8192]{0}', space=vmem, size = 0x2000, scoped, tag = 'input window, operand 2, single buffered']
    #allocation5 [shape = 's32[1]{0}', space=sflag, size = 0x4, scoped, tag = 'scoped memory for tpu_custom_call.1']
    #allocation6 [shape = 's32[1]{0}', space=sflag, size = 0x4, scoped, tag = 'scoped memory for tpu_custom_call.1']
    #allocation7 [shape = 'u8[8192]{0}', space=vmem, size = 0x2000, scoped, tag = 'output window, operand 0, single buffered']
    %10 = vsyncpa [#allocation5], 0
    %11 = vsyncpa [#allocation6], 0
    // Predicated region
    $region2: #{tpu_custom_call.1} parent=1 // pred_check
      _
    $region3: #{tpu_custom_call.1} parent=1 // pred_check_branch
      %13 = sbr.rel (0) target = $region5
    $region4: #{tpu_custom_call.1} parent=1 // pred_region
      _
    $region5: #{tpu_custom_call.1} parent=1 // pred_fallthru
      _
    // Predicated region
    $region6: #{tpu_custom_call.1} parent=1 // pred_check
      _
    $region7: #{tpu_custom_call.1} parent=1 // pred_check_branch
      %15 = sbr.rel (0) target = $region9
    $region8: #{tpu_custom_call.1} parent=1 // pred_region
      _
    $region9: #{tpu_custom_call.1} parent=1 // pred_fallthru
      _
    // Predicated region
    $region10: #{tpu_custom_call.1} parent=1 // pred_check
      _
    $region11: #{tpu_custom_call.1} parent=1 // pred_check_branch
      %17 = sbr.rel (0) target = $region13
    $region12: #{tpu_custom_call.1} parent=1 // pred_region
      %s19 = ssub.s32 256, 256
      %20 = vsyncadd [#allocation5], %s19
      %s22 = sshll.u32 [#allocation4], 4
      %s23 = int_to_ptr.vmem [resolvable:$true] %s22
      %25 = dma.hbm_to_vmem [thread:$0]  %s2, 256, %s23, [#allocation5]
    $region13: #{tpu_custom_call.1} parent=1 // pred_fallthru
      _
    // Predicated region
    $region14: #{tpu_custom_call.1} parent=1 // pred_check
      _
    $region15: #{tpu_custom_call.1} parent=1 // pred_check_branch
      %27 = sbr.rel (0) target = $region17
    $region16: #{tpu_custom_call.1} parent=1 // pred_region
      %28 = dma.done [#allocation5], 256
    $region17: #{tpu_custom_call.1} parent=1 // pred_fallthru
      _
    %s29 = sld [smem:[#allocation2]]
    %s30 = sld [smem:[#allocation3]]
    %v31 = vld [vmem:[#allocation4] sm:$0xff]
    %v32 = vld [vmem:[#allocation4 + $0x8] sm:$0xff]
    %v33 = vstv %s29
    %v34 = vmul.f32 %v33, %v31
    %v35 = vmul.f32 %v33, %v32
    %v36 = vstv %s30
    %v37 = vadd.f32 %v34, %v36
    %v38 = vadd.f32 %v35, %v36
    %39 = vst [vmem:[#allocation7] sm:$0xff] %v37
    %40 = vst [vmem:[#allocation7 + $0x8] sm:$0xff] %v38
    // Predicated region
    $region18: #{tpu_custom_call.1} parent=1 // pred_check
      _
    $region19: #{tpu_custom_call.1} parent=1 // pred_check_branch
      %42 = sbr.rel (0) target = $region21
    $region20: #{tpu_custom_call.1} parent=1 // pred_region
      %s44 = ssub.s32 256, 256
      %45 = vsyncadd [#allocation6], %s44
      %s47 = sshll.u32 [#allocation7], 4
      %s48 = int_to_ptr.vmem [resolvable:$true] %s47
      %50 = dma.vmem_to_hbm [thread:$0]  %s48, 256, %s3, [#allocation6]
    $region21: #{tpu_custom_call.1} parent=1 // pred_fallthru
      _
    // Predicated region
    $region22: #{tpu_custom_call.1} parent=1 // pred_check
      _
    $region23: #{tpu_custom_call.1} parent=1 // pred_check_branch
      %52 = sbr.rel (0) target = $region25
    $region24: #{tpu_custom_call.1} parent=1 // pred_region
      %53 = dma.done [#allocation6], 256
    $region25: #{tpu_custom_call.1} parent=1 // pred_fallthru
      _
    %54 = vsyncpa [#allocation5], 1
    %55 = vsyncpa [#allocation6], 1

</llo_original>
